<compile_context>
chip_gen: v7x
topology: tpu7x:2x2x1
jax: 0.10.0
libtpu: 0.0.40
codegen_flags: <defaults>
</compile_context>

<pallas_src>
import functools

import jax
import jax.numpy as jnp
from jax.experimental import pallas as pl
from jax.experimental.pallas import tpu as pltpu

# synthetic hyper-params consistent with Adversary(z_size, hs_g1, hs_g2, hs_g3, xout_size)
BATCH = 16
Z_SIZE = 32
HS_G1 = 64
HS_G2 = 128
HS_G3 = 64
XOUT = 256

LANE = 128


def _round_up(x, m):
    return ((x + m - 1) // m) * m


def _cdiv(a, b):
    return -(-a // b)


def _leaky_relu(x, slope=0.2):
    return jnp.where(x > 0, x, slope * x)


def _bf16_vpu_native():
    """bf16 activations only where the VPU/EUP are bf16-native (v6e / v7x)."""
    try:
        kind = jax.devices()[0].device_kind.lower()
    except Exception:
        return True
    return not any(tag in kind for tag in ("v2", "v3", "v4", "v5"))


_BF16_VPU_NATIVE = _bf16_vpu_native()

# pl.Buffered(1) on the resident params is a VMEM-headroom optimization; if the
# installed Pallas rejects it we silently fall back to default double buffering.
_SINGLE_BUFFER_RESIDENT = True


def _make_generator_kernel(act_dtype):
    """Fused 4-layer MLP generator; all operands resident in VMEM."""

    def kernel(z_ref,
               w1_ref, b1_ref,
               w2_ref, b2_ref,
               w3_ref, b3_ref,
               w4_ref, b4_ref,
               o_ref):
        def layer(x, w_ref, b_ref, act):
            # MXU matmul in the weight dtype (f32 or bf16), f32 accumulation.
            y = jnp.dot(x.astype(w_ref.dtype), w_ref[...],
                        preferred_element_type=jnp.float32)
            # bias (f32) added on the f32 accumulator, then one cast per layer
            # to the activation dtype (bf16 on v6e/v7x bf16 path, else f32).
            y = (y + b_ref[...]).astype(act_dtype)
            return act(y)

        h = layer(z_ref[...], w1_ref, b1_ref, _leaky_relu)
        h = layer(h, w2_ref, b2_ref, _leaky_relu)
        h = layer(h, w3_ref, b3_ref, _leaky_relu)
        o_ref[...] = layer(h, w4_ref, b4_ref, jnp.tanh).astype(o_ref.dtype)

    return kernel


def _dtypes_for(wdtype):
    bf16_path = wdtype == jnp.bfloat16
    act_dtype = jnp.bfloat16 if (bf16_path and _BF16_VPU_NATIVE) else jnp.float32
    out_dtype = jnp.bfloat16 if bf16_path else jnp.float32
    return act_dtype, out_dtype


@jax.jit
def _small_forward(z, w1, b1, w2, b2, w3, b3, w4, b4):
    """Grid-less path: whole working set (< 1 MiB) lives in VMEM; one call."""
    out_dim = b4.shape[-1]
    act_dtype, out_dtype = _dtypes_for(w1.dtype)
    z = z.astype(w1.dtype)
    vmem_spec = pl.BlockSpec(memory_space=pltpu.MemorySpace.VMEM)
    return pl.pallas_call(
        _make_generator_kernel(act_dtype),
        out_shape=jax.ShapeDtypeStruct((z.shape[0], out_dim), out_dtype),
        in_specs=[vmem_spec] * 9,
        out_specs=vmem_spec,
    )(z, w1, b1, w2, b2, w3, b3, w4, b4)


def _tiled_vmem_limit_bytes(tile, zdim, out_dim, z_itemsize, out_itemsize, params):
    lane_cols = lambda n: _round_up(n, LANE)
    io = 2 * tile * lane_cols(zdim) * z_itemsize           # double-buffered z tiles
    io += 2 * tile * lane_cols(out_dim) * out_itemsize     # double-buffered out tiles
    resident = 2 * sum(p.size * p.dtype.itemsize for p in params)  # worst case
    scratch = 4 * tile * lane_cols(out_dim) * 4             # f32 accs + hidden activations
    est = io + resident + scratch + (2 << 20)                # + 2 MiB slack
    return int(min(max(est, 32 << 20), 128 << 20))


@functools.partial(jax.jit, static_argnames=("tile", "single_buffer_params"))
def _tiled_forward(z, w1, b1, w2, b2, w3, b3, w4, b4, *, tile, single_buffer_params):
    """Batch-tiled path: weights stay resident (constant block index), batch
    axis marked "parallel" for megacore sharding, tail padded to a full tile."""
    b, zdim = z.shape
    out_dim = b4.shape[-1]
    act_dtype, out_dtype = _dtypes_for(w1.dtype)
    z = z.astype(w1.dtype)  # bf16 z from the wrapper on the bf16 path

    steps = _cdiv(b, tile)
    padded_b = steps * tile
    if padded_b != b:
        z = jnp.pad(z, ((0, padded_b - b), (0, 0)))

    params = (w1, b1, w2, b2, w3, b3, w4, b4)

    def resident(a):
        if single_buffer_params:
            return pl.BlockSpec(a.shape, lambda i: (0, 0),
                                pipeline_mode=pl.Buffered(1))
        return pl.BlockSpec(a.shape, lambda i: (0, 0))

    in_specs = [pl.BlockSpec((tile, zdim), lambda i: (i, 0))]
    in_specs += [resident(a) for a in params]
    out_specs = pl.BlockSpec((tile, out_dim), lambda i: (i, 0))

    vmem_limit = _tiled_vmem_limit_bytes(
        tile, zdim, out_dim, z.dtype.itemsize, jnp.dtype(out_dtype).itemsize, params)

    out = pl.pallas_call(
        _make_generator_kernel(act_dtype),
        out_shape=jax.ShapeDtypeStruct((padded_b, out_dim), out_dtype),
        grid_spec=pl.GridSpec(grid=(steps,), in_specs=in_specs, out_specs=out_specs),
        compiler_params=pltpu.CompilerParams(
            dimension_semantics=("parallel",),
            vmem_limit_bytes=vmem_limit),
    )(z, *params)
    return out[:b] if padded_b != b else out


def _pick_tile(b, batch_tile):
    # Keep >= 2 grid steps so the parallel axis can shard across v7x's 2 TCs.
    half = _round_up(_cdiv(b, 2), 8)
    return max(256, min(batch_tile, half))


def gan_forward(z, kparams, *, batch_tile=2048):
    """z: (batch, Z_SIZE) f32; kparams from prepare_params() ((in, out) weights)."""
    global _SINGLE_BUFFER_RESIDENT
    b = z.shape[0]
    args = (z,
            kparams["w1"], kparams["b1"],
            kparams["w2"], kparams["b2"],
            kparams["w3"], kparams["b3"],
            kparams["w4"], kparams["b4"])

    # Small batches: single grid-less invocation (no per-step pipeline cost).
    # NOTE: at this size the call is launch/epilogue bound; amortize by batching
    # multiple generator invocations inside one surrounding jit at the call site.
    if b <= max(256, min(batch_tile, 1024)):
        return _small_forward(*args)

    tile = _pick_tile(b, batch_tile)
    if _SINGLE_BUFFER_RESIDENT:
        try:
            return _tiled_forward(*args, tile=tile, single_buffer_params=True)
        except Exception:
            _SINGLE_BUFFER_RESIDENT = False  # Buffered(1) unsupported: fall back
    return _tiled_forward(*args, tile=tile, single_buffer_params=False)


def init_params(key):
    """nn.Linear-style init, stored as (in, out) == PyTorch (out, in) transposed."""
    dims = [(Z_SIZE, HS_G1), (HS_G1, HS_G2), (HS_G2, HS_G3), (HS_G3, XOUT)]
    params = {}
    for idx, (fan_in, fan_out) in enumerate(dims, start=1):
        key, kw, kb = jax.random.split(key, 3)
        bound = 1.0 / jnp.sqrt(jnp.float32(fan_in))
        params[f"w{idx}"] = jax.random.uniform(
            kw, (fan_in, fan_out), jnp.float32, -bound, bound)
        params[f"b{idx}"] = jax.random.uniform(
            kb, (1, fan_out), jnp.float32, -bound, bound)
    return params


def prepare_params(raw, *, use_bf16_matmul=False):
    """Zero-pad narrow hidden dims (64) up to the 128-lane width (results are
    unchanged: padded biases are 0, LeakyReLU(0)=0, padded weight rows of the
    next layer contribute nothing).  Optionally cast weights to bf16 for the
    bf16-native MXU; biases stay f32 (added on the f32 accumulator)."""
    h1p, h2p, h3p = (_round_up(h, LANE) for h in (HS_G1, HS_G2, HS_G3))

    def pad2(x, rows, cols):
        return jnp.pad(x, ((0, rows - x.shape[0]), (0, cols - x.shape[1])))

    wdt = jnp.bfloat16 if use_bf16_matmul else jnp.float32
    return {
        "w1": pad2(raw["w1"], Z_SIZE, h1p).astype(wdt),
        "b1": pad2(raw["b1"], 1, h1p),
        "w2": pad2(raw["w2"], h1p, h2p).astype(wdt),
        "b2": pad2(raw["b2"], 1, h2p),
        "w3": pad2(raw["w3"], h2p, h3p).astype(wdt),
        "b3": pad2(raw["b3"], 1, h3p),
        "w4": pad2(raw["w4"], h3p, XOUT).astype(wdt),
        "b4": raw["b4"],
    }


def reference_forward(z, raw):
    h = z
    for idx in range(1, 4):
        h = h @ raw[f"w{idx}"] + raw[f"b{idx}"]
        h = jnp.where(h > 0, h, 0.2 * h)
    h = h @ raw["w4"] + raw["b4"]
    return jnp.tanh(h)


if __name__ == "__main__":
    key = jax.random.PRNGKey(0)
    key, kz_small, kz_big = jax.random.split(key, 3)
    raw = init_params(key)

    # 1) Small batch (the module's batch_size regime): grid-less, f32 (module precision).
    z_small = jax.random.normal(kz_small, (BATCH, Z_SIZE), jnp.float32)
    out_small = jax.block_until_ready(
        gan_forward(z_small, prepare_params(raw, use_bf16_matmul=False)))
    ref_small = reference_forward(z_small, raw)
    assert out_small.shape == (BATCH, XOUT)
    assert out_small.dtype == jnp.float32
    assert jnp.allclose(out_small, ref_small, atol=1e-5, rtol=1e-5), \
        "small-batch mismatch vs reference"

    # 2) Large, non-multiple batch: tiled path (2 grid steps, padded tail),
    #    bf16 weights/activations/output with f32 MXU accumulation.
    BIG = 3000
    z_big = jax.random.normal(kz_big, (BIG, Z_SIZE), jnp.float32)
    out_big = jax.block_until_ready(
        gan_forward(z_big, prepare_params(raw, use_bf16_matmul=True),
                    batch_tile=2048))
    ref_big = reference_forward(z_big, raw)
    assert out_big.shape == (BIG, XOUT)
    assert jnp.allclose(out_big.astype(jnp.float32), ref_big, atol=5e-2, rtol=0.0), \
        "tiled bf16-batch mismatch vs reference"

    print("KERNEL_OK")
</pallas_src>

<mosaic_0001>
module attributes {stable_mosaic.version = 11 : i64} {
  func.func @kernel(%arg0: memref<16x32xf32, #tpu.memory_space<vmem>>, %arg1: memref<32x128xf32, #tpu.memory_space<vmem>>, %arg2: memref<1x128xf32, #tpu.memory_space<vmem>>, %arg3: memref<128x128xf32, #tpu.memory_space<vmem>>, %arg4: memref<1x128xf32, #tpu.memory_space<vmem>>, %arg5: memref<128x128xf32, #tpu.memory_space<vmem>>, %arg6: memref<1x128xf32, #tpu.memory_space<vmem>>, %arg7: memref<128x256xf32, #tpu.memory_space<vmem>>, %arg8: memref<1x256xf32, #tpu.memory_space<vmem>>, %arg9: memref<16x256xf32, #tpu.memory_space<vmem>>) attributes {dimension_semantics = [], scalar_prefetch = 0 : i64, scratch_operands = 0 : i64, tpu.core_type = #tpu.core_type<tc>} {
    %c0 = arith.constant 0 : index
    %c0_0 = arith.constant 0 : index
    %0 = vector.load %arg0[%c0, %c0_0] : memref<16x32xf32, #tpu.memory_space<vmem>>, vector<16x32xf32>
    %c0_1 = arith.constant 0 : index
    %c0_2 = arith.constant 0 : index
    %1 = vector.load %arg1[%c0_1, %c0_2] : memref<32x128xf32, #tpu.memory_space<vmem>>, vector<32x128xf32>
    %cst = arith.constant dense<0.000000e+00> : vector<16x128xf32>
    %2 = tpu.matmul %0, %1, %cst {dimension_numbers = #tpu.dot_dimension_numbers<[1], [0], [0], [1], [0, 0, 1, 1], [], []>} : vector<16x32xf32>, vector<32x128xf32>, vector<16x128xf32> -> vector<16x128xf32>
    %c0_3 = arith.constant 0 : index
    %c0_4 = arith.constant 0 : index
    %3 = vector.load %arg2[%c0_3, %c0_4] : memref<1x128xf32, #tpu.memory_space<vmem>>, vector<1x128xf32>
    %4 = vector.broadcast %3 : vector<1x128xf32> to vector<16x128xf32>
    %5 = arith.addf %2, %4 : vector<16x128xf32>
    %cst_5 = arith.constant 0.000000e+00 : f32
    %6 = vector.broadcast %cst_5 : f32 to vector<16x128xf32>
    %7 = arith.cmpf ogt, %5, %6 : vector<16x128xf32>
    %cst_6 = arith.constant 2.000000e-01 : f32
    %8 = vector.broadcast %cst_6 : f32 to vector<16x128xf32>
    %9 = arith.mulf %8, %5 : vector<16x128xf32>
    %10 = arith.select %7, %5, %9 : vector<16x128xi1>, vector<16x128xf32>
    %c0_7 = arith.constant 0 : index
    %c0_8 = arith.constant 0 : index
    %11 = vector.load %arg3[%c0_7, %c0_8] : memref<128x128xf32, #tpu.memory_space<vmem>>, vector<128x128xf32>
    %cst_9 = arith.constant dense<0.000000e+00> : vector<16x128xf32>
    %12 = tpu.matmul %10, %11, %cst_9 {dimension_numbers = #tpu.dot_dimension_numbers<[1], [0], [0], [1], [0, 0, 1, 1], [], []>} : vector<16x128xf32>, vector<128x128xf32>, vector<16x128xf32> -> vector<16x128xf32>
    %c0_10 = arith.constant 0 : index
    %c0_11 = arith.constant 0 : index
    %13 = vector.load %arg4[%c0_10, %c0_11] : memref<1x128xf32, #tpu.memory_space<vmem>>, vector<1x128xf32>
    %14 = vector.broadcast %13 : vector<1x128xf32> to vector<16x128xf32>
    %15 = arith.addf %12, %14 : vector<16x128xf32>
    %cst_12 = arith.constant 0.000000e+00 : f32
    %16 = vector.broadcast %cst_12 : f32 to vector<16x128xf32>
    %17 = arith.cmpf ogt, %15, %16 : vector<16x128xf32>
    %cst_13 = arith.constant 2.000000e-01 : f32
    %18 = vector.broadcast %cst_13 : f32 to vector<16x128xf32>
    %19 = arith.mulf %18, %15 : vector<16x128xf32>
    %20 = arith.select %17, %15, %19 : vector<16x128xi1>, vector<16x128xf32>
    %c0_14 = arith.constant 0 : index
    %c0_15 = arith.constant 0 : index
    %21 = vector.load %arg5[%c0_14, %c0_15] : memref<128x128xf32, #tpu.memory_space<vmem>>, vector<128x128xf32>
    %cst_16 = arith.constant dense<0.000000e+00> : vector<16x128xf32>
    %22 = tpu.matmul %20, %21, %cst_16 {dimension_numbers = #tpu.dot_dimension_numbers<[1], [0], [0], [1], [0, 0, 1, 1], [], []>} : vector<16x128xf32>, vector<128x128xf32>, vector<16x128xf32> -> vector<16x128xf32>
    %c0_17 = arith.constant 0 : index
    %c0_18 = arith.constant 0 : index
    %23 = vector.load %arg6[%c0_17, %c0_18] : memref<1x128xf32, #tpu.memory_space<vmem>>, vector<1x128xf32>
    %24 = vector.broadcast %23 : vector<1x128xf32> to vector<16x128xf32>
    %25 = arith.addf %22, %24 : vector<16x128xf32>
    %cst_19 = arith.constant 0.000000e+00 : f32
    %26 = vector.broadcast %cst_19 : f32 to vector<16x128xf32>
    %27 = arith.cmpf ogt, %25, %26 : vector<16x128xf32>
    %cst_20 = arith.constant 2.000000e-01 : f32
    %28 = vector.broadcast %cst_20 : f32 to vector<16x128xf32>
    %29 = arith.mulf %28, %25 : vector<16x128xf32>
    %30 = arith.select %27, %25, %29 : vector<16x128xi1>, vector<16x128xf32>
    %c0_21 = arith.constant 0 : index
    %c0_22 = arith.constant 0 : index
    %31 = vector.load %arg7[%c0_21, %c0_22] : memref<128x256xf32, #tpu.memory_space<vmem>>, vector<128x256xf32>
    %cst_23 = arith.constant dense<0.000000e+00> : vector<16x256xf32>
    %32 = tpu.matmul %30, %31, %cst_23 {dimension_numbers = #tpu.dot_dimension_numbers<[1], [0], [0], [1], [0, 0, 1, 1], [], []>} : vector<16x128xf32>, vector<128x256xf32>, vector<16x256xf32> -> vector<16x256xf32>
    %c0_24 = arith.constant 0 : index
    %c0_25 = arith.constant 0 : index
    %33 = vector.load %arg8[%c0_24, %c0_25] : memref<1x256xf32, #tpu.memory_space<vmem>>, vector<1x256xf32>
    %34 = vector.broadcast %33 : vector<1x256xf32> to vector<16x256xf32>
    %35 = arith.addf %32, %34 : vector<16x256xf32>
    %36 = math.tanh %35 : vector<16x256xf32>
    %c0_26 = arith.constant 0 : index
    %c0_27 = arith.constant 0 : index
    %37 = vector.load %arg9[%c0_26, %c0_27] : memref<16x256xf32, #tpu.memory_space<vmem>>, vector<16x256xf32>
    tpu.vector_store %arg9[%c0_26, %c0_27], %36 {strides = array<i32>} : memref<16x256xf32, #tpu.memory_space<vmem>>, vector<16x256xf32>,
    return
  }
}

</mosaic_0001>

<llo_original>
// kernel: _small_forward.1
$region0: #{_small_forward.1}
  #allocation0 [shape = 'u32[]', space=smem, size = 0x4, offset = 0x4, fixed_abs, tag = 'smem constant byte address 0x4 - core index']
  #allocation1 [shape = 'u32[144,128]{1,0:T(1,128)}', space=vmem, size = 0x12000, scoped, tag = 'internal scratch']
  %s0 = inlined_call_operand.hbm [shape: f32[16,32], index: 0, kind: input, shape index: {}]
  %s1 = inlined_call_operand.hbm [shape: f32[32,128], index: 1, kind: input, shape index: {}]
  %s2 = inlined_call_operand.vmem [shape: f32[1,128], index: 2, kind: input, shape index: {}]
  %s3 = inlined_call_operand.hbm [shape: f32[128,128], index: 3, kind: input, shape index: {}]
  %s4 = inlined_call_operand.vmem [shape: f32[1,128], index: 4, kind: input, shape index: {}]
  %s5 = inlined_call_operand.hbm [shape: f32[128,128], index: 5, kind: input, shape index: {}]
  %s6 = inlined_call_operand.vmem [shape: f32[1,128], index: 6, kind: input, shape index: {}]
  %s7 = inlined_call_operand.hbm [shape: f32[128,256], index: 7, kind: input, shape index: {}]
  %s8 = inlined_call_operand.vmem [shape: f32[1,256], index: 8, kind: input, shape index: {}]
  %s9 = inlined_call_operand.hbm [shape: f32[16,256], index: 9, kind: output, shape index: {}]
  %s10 = sld [smem:[#allocation0]]
  $region66: #{_small_forward.1} parent=0
    _
  %s12 = ssub.s32 1, %s10
  %s13 = scalar_select 0, %s12, %s10
  $region1: #{_small_forward.1} parent=0
    #allocation2 [shape = 'u8[8192]{0}', space=vmem, size = 0x2000, scoped, tag = 'input window, operand 0, single buffered']
    #allocation3 [shape = 's32[1]{0}', space=sflag, size = 0x4, scoped, tag = 'scoped memory for _small_forward.1']
    #allocation4 [shape = 's32[1]{0}', space=sflag, size = 0x4, scoped, tag = 'scoped memory for _small_forward.1']
    #allocation5 [shape = 'u8[16384]{0}', space=vmem, size = 0x4000, scoped, tag = 'input window, operand 1, single buffered']
    #allocation6 [shape = 's32[1]{0}', space=sflag, size = 0x4, scoped, tag = 'scoped memory for _small_forward.1']
    #allocation7 [shape = 'u8[65536]{0}', space=vmem, size = 0x10000, scoped, tag = 'input window, operand 3, single buffered']
    #allocation8 [shape = 'u8[65536]{0}', space=vmem, size = 0x10000, scoped, tag = 'input window, operand 5, single buffered']
    #allocation9 [shape = 's32[1]{0}', space=sflag, size = 0x4, scoped, tag = 'scoped memory for _small_forward.1']
    #allocation10 [shape = 'u8[131072]{0}', space=vmem, size = 0x20000, scoped, tag = 'input window, operand 7, single buffered']
    #allocation11 [shape = 'u8[16384]{0}', space=vmem, size = 0x4000, scoped, tag = 'output window, operand 0, single buffered']
    %14 = vsyncpa [#allocation3], 0
    %15 = vsyncpa [#allocation6], 0
    %16 = vsyncpa [#allocation9], 0
    %17 = vsyncpa [#allocation4], 0
    // Predicated region
    $region2: #{_small_forward.1} parent=1 // pred_check
      _
    $region3: #{_small_forward.1} parent=1 // pred_check_branch
      %19 = sbr.rel (0) target = $region5
    $region4: #{_small_forward.1} parent=1 // pred_region
      %s21 = ssub.s32 256, 256
      %22 = vsyncadd [#allocation3], %s21
      %s23 = sshll.u32 [#allocation2], 4
      %s24 = int_to_ptr.vmem [resolvable:$true] %s23
      %29 = dma.hbm_to_vmem [thread:$0]  %s0, 256, %s24, [#allocation3], 128, 128, 8
    $region5: #{_small_forward.1} parent=1 // pred_fallthru
      _
    // Predicated region
    $region6: #{_small_forward.1} parent=1 // pred_check
      _
    $region7: #{_small_forward.1} parent=1 // pred_check_branch
      %31 = sbr.rel (0) target = $region9
    $region8: #{_small_forward.1} parent=1 // pred_region
      %s33 = ssub.s32 512, 512
      %34 = vsyncadd [#allocation6], %s33
      %s35 = sshll.u32 [#allocation5], 4
      %s36 = int_to_ptr.vmem [resolvable:$true] %s35
      %41 = dma.hbm_to_vmem [thread:$0]  %s1, 512, %s36, [#allocation6], 128, 128, 8
    $region9: #{_small_forward.1} parent=1 // pred_fallthru
      _
    // Predicated region
    $region10: #{_small_forward.1} parent=1 // pred_check
      _
    $region11: #{_small_forward.1} parent=1 // pred_check_branch
      %43 = sbr.rel (0) target = $region13
    $region12: #{_small_forward.1} parent=1 // pred_region
      _
    $region13: #{_small_forward.1} parent=1 // pred_fallthru
      _
    // Predicated region
    $region14: #{_small_forward.1} parent=1 // pred_check
      _
    $region15: #{_small_forward.1} parent=1 // pred_check_branch
      %45 = sbr.rel (0) target = $region17
    $region16: #{_small_forward.1} parent=1 // pred_region
      %s47 = ssub.s32 2048, 2048
      %48 = vsyncadd [#allocation6], %s47
      %s49 = sshll.u32 [#allocation7], 4
      %s50 = int_to_ptr.vmem [resolvable:$true] %s49
      %55 = dma.hbm_to_vmem [thread:$0]  %s3, 2048, %s50, [#allocation6], 128, 128, 8
    $region17: #{_small_forward.1} parent=1 // pred_fallthru
      _
    // Predicated region
    $region18: #{_small_forward.1} parent=1 // pred_check
      _
    $region19: #{_small_forward.1} parent=1 // pred_check_branch
      %57 = sbr.rel (0) target = $region21
    $region20: #{_small_forward.1} parent=1 // pred_region
      _
    $region21: #{_small_forward.1} parent=1 // pred_fallthru
      _
    // Predicated region
    $region22: #{_small_forward.1} parent=1 // pred_check
      _
    $region23: #{_small_forward.1} parent=1 // pred_check_branch
      %59 = sbr.rel (0) target = $region25
    $region24: #{_small_forward.1} parent=1 // pred_region
      %s61 = ssub.s32 2048, 2048
      %62 = vsyncadd [#allocation9], %s61
      %s63 = sshll.u32 [#allocation8], 4
      %s64 = int_to_ptr.vmem [resolvable:$true] %s63
      %69 = dma.hbm_to_vmem [thread:$0]  %s5, 2048, %s64, [#allocation9], 128, 128, 8
    $region25: #{_small_forward.1} parent=1 // pred_fallthru
      _
    // Predicated region
    $region26: #{_small_forward.1} parent=1 // pred_check
      _
    $region27: #{_small_forward.1} parent=1 // pred_check_branch
      %71 = sbr.rel (0) target = $region29
    $region28: #{_small_forward.1} parent=1 // pred_region
      _
    $region29: #{_small_forward.1} parent=1 // pred_fallthru
      _
    // Predicated region
    $region30: #{_small_forward.1} parent=1 // pred_check
      _
    $region31: #{_small_forward.1} parent=1 // pred_check_branch
      %73 = sbr.rel (0) target = $region33
    $region32: #{_small_forward.1} parent=1 // pred_region
      %s75 = ssub.s32 4096, 4096
      %76 = vsyncadd [#allocation9], %s75
      %s77 = sshll.u32 [#allocation10], 4
      %s78 = int_to_ptr.vmem [resolvable:$true] %s77
      %83 = dma.hbm_to_vmem [thread:$0]  %s7, 4096, %s78, [#allocation9], 256, 256, 16
    $region33: #{_small_forward.1} parent=1 // pred_fallthru
      _
    // Predicated region
    $region34: #{_small_forward.1} parent=1 // pred_check
      _
    $region35: #{_small_forward.1} parent=1 // pred_check_branch
      %85 = sbr.rel (0) target = $region37
    $region36: #{_small_forward.1} parent=1 // pred_region
      _
    $region37: #{_small_forward.1} parent=1 // pred_fallthru
      _
    // Predicated region
    $region38: #{_small_forward.1} parent=1 // pred_check
      _
    $region39: #{_small_forward.1} parent=1 // pred_check_branch
      %87 = sbr.rel (0) target = $region41
    $region40: #{_small_forward.1} parent=1 // pred_region
      %88 = dma.done [#allocation3], 256
    $region41: #{_small_forward.1} parent=1 // pred_fallthru
      _
    // Predicated region
    $region42: #{_small_forward.1} parent=1 // pred_check
      _
    $region43: #{_small_forward.1} parent=1 // pred_check_branch
      %90 = sbr.rel (0) target = $region45
    $region44: #{_small_forward.1} parent=1 // pred_region
      %91 = dma.done [#allocation6], 512
    $region45: #{_small_forward.1} parent=1 // pred_fallthru
      _
    // Predicated region
    $region46: #{_small_forward.1} parent=1 // pred_check
      _
    $region47: #{_small_forward.1} parent=1 // pred_check_branch
      %93 = sbr.rel (0) target = $region49
    $region48: #{_small_forward.1} parent=1 // pred_region
      %94 = dma.done [#allocation6], 2048
    $region49: #{_small_forward.1} parent=1 // pred_fallthru
      _
    // Predicated region
    $region50: #{_small_forward.1} parent=1 // pred_check
      _
    $region51: #{_small_forward.1} parent=1 // pred_check_branch
      %96 = sbr.rel (0) target = $region53
    $region52: #{_small_forward.1} parent=1 // pred_region
      %97 = dma.done [#allocation9], 2048
    $region53: #{_small_forward.1} parent=1 // pred_fallthru
      _
    // Predicated region
    $region54: #{_small_forward.1} parent=1 // pred_check
      _
    $region55: #{_small_forward.1} parent=1 // pred_check_branch
      %99 = sbr.rel (0) target = $region57
    $region56: #{_small_forward.1} parent=1 // pred_region
      %100 = dma.done [#allocation9], 4096
    $region57: #{_small_forward.1} parent=1 // pred_fallthru
      _
    %v101 = vld [vmem:[#allocation2] sm:$0xff]
    %v102 = vld [vmem:[#allocation2 + $0x8] sm:$0xff]
    %v103 = vld [vmem:[#allocation5] sm:$0xff]
    %v104 = vld [vmem:[#allocation5 + $0x8] sm:$0xff]
    %v105 = vld [vmem:[#allocation5 + $0x10] sm:$0xff]
    %v106 = vld [vmem:[#allocation5 + $0x18] sm:$0xff]
    %v107 = vld [vmem:[%s2] sm:$0x1]
    %v109 = vlaneseq
    %v110 = vshrl.u32 %v109, 7
    %v111 = vsub.s32 0, %v110
    %v112 = vrot.slane %v107, %v111
    %vm114 = vcmask 261120
    %v116 = vsel %vm114, %v101, 0
    %v119 = vsel %vm114, %v102, 0
    %121 = vmatprep.subr.mxu0 0.0
    %122 = vmatpush1.msra.mxu0 %v103
    %123 = vmatprep.subr.mxu0 0.0
    %124 = vmatpush1.msra.mxu0 %v104
    %125 = vmatprep.subr.mxu0 0.0
    %126 = vmatpush1.msra.mxu0 %v105
    %127 = vmatprep.subr.mxu0 0.0
    %128 = vmatpush1.msra.mxu0 %v106
    %129 = vmatprep.subr.mxu0 0.0
    %130 = vmatpush1.msra.mxu0 0.0
    %131 = vmatprep.subr.mxu0 0.0
    %132 = vmatpush1.msra.mxu0 0.0
    %133 = vmatprep.subr.mxu0 0.0
    %134 = vmatpush1.msra.mxu0 0.0
    %135 = vmatprep.subr.mxu0 0.0
    %136 = vmatpush1.msra.mxu0 0.0
    %137 = vmatprep.subr.mxu0 0.0
    %138 = vmatpush1.msra.mxu0 0.0
    %139 = vmatprep.subr.mxu0 0.0
    %140 = vmatpush1.msra.mxu0 0.0
    %141 = vmatprep.subr.mxu0 0.0
    %142 = vmatpush1.msra.mxu0 0.0
    %143 = vmatprep.subr.mxu0 0.0
    %144 = vmatpush1.msra.mxu0 0.0
    %145 = vmatprep.subr.mxu0 0.0
    %146 = vmatpush1.msra.mxu0 0.0
    %147 = vmatprep.subr.mxu0 0.0
    %148 = vmatpush1.msra.mxu0 0.0
    %149 = vmatprep.subr.mxu0 0.0
    %150 = vmatpush1.msra.mxu0 0.0
    %151 = vmatprep.subr.mxu0 0.0
    %152 = vmatpush1.msra.mxu0 0.0
    %153 = vmatprep.subr.mxu0 0.0
    %154 = vmatpush1.msra.mxu0 0.0
    %155 = vmatprep.subr.mxu0 0.0
    %156 = vmatpush1.msra.mxu0 0.0
    %157 = vmatprep.subr.mxu0 0.0
    %158 = vmatpush1.msra.mxu0 0.0
    %159 = vmatprep.subr.mxu0 0.0
    %160 = vmatpush1.msra.mxu0 0.0
    %161 = vmatprep.subr.mxu0 0.0
    %162 = vmatpush1.msra.mxu0 0.0
    %163 = vmatprep.subr.mxu0 0.0
    %164 = vmatpush1.msra.mxu0 0.0
    %165 = vmatprep.subr.mxu0 0.0
    %166 = vmatpush1.msra.mxu0 0.0
    %167 = vmatprep.subr.mxu0 0.0
    %168 = vmatpush1.msra.mxu0 0.0
    %169 = vmatprep.subr.mxu0 0.0
    %170 = vmatpush1.msra.mxu0 0.0
    %171 = vmatprep.subr.mxu0 0.0
    %172 = vmatpush1.msra.mxu0 0.0
    %173 = vmatprep.subr.mxu0 0.0
    %174 = vmatpush1.msra.mxu0 0.0
    %175 = vmatprep.subr.mxu0 0.0
    %176 = vmatpush1.msra.mxu0 0.0
    %177 = vmatprep.subr.mxu0 0.0
    %178 = vmatpush1.msra.mxu0 0.0
    %179 = vmatprep.subr.mxu0 0.0
    %180 = vmatpush1.msra.mxu0 0.0
    %181 = vmatprep.subr.mxu0 0.0
    %182 = vmatpush1.msra.mxu0 0.0
    %183 = vmatprep.subr.mxu0 0.0
    %184 = vmatpush1.msra.mxu0 0.0
    %185 = vmatprep.mubr.f32.mxu0 0.0
    %186 = vmatmul.mubr.f32.gmra.mrb[0].mxu0 %v116
    %v187 = vpop.f32.mrb[0].mxu0
    %v188 = vadd.f32 %v112, %v187
    %v189 = vpop.f32.mrb[0].mxu0
    %190 = vmatprep.mubr.f32.mxu0 0.0
    %191 = vmatmul.mubr.f32.gmra.mrb[0].mxu0 %v119
    %v192 = vpop.f32.mrb[0].mxu0
    %v193 = vadd.f32 %v112, %v192
    %v194 = vpop.f32.mrb[0].mxu0
    %195 = vdwg.mxu0
    %vm196 = vcmp.gt.f32.partialorder %v188, 0.0
    %vm197 = vcmp.gt.f32.partialorder %v193, 0.0
    %v198 = vmul.f32 %v188, 0.2
    %v199 = vmul.f32 %v193, 0.2
    %v200 = vsel %vm196, %v188, %v198
    %v201 = vsel %vm197, %v193, %v199
    %v202 = vld [vmem:[#allocation7] sm:$0xff]
    %v203 = vld [vmem:[#allocation7 + $0x8] sm:$0xff]
    %v204 = vld [vmem:[#allocation7 + $0x10] sm:$0xff]
    %v205 = vld [vmem:[#allocation7 + $0x18] sm:$0xff]
    %v206 = vld [vmem:[#allocation7 + $0x20] sm:$0xff]
    %v207 = vld [vmem:[#allocation7 + $0x28] sm:$0xff]
    %v208 = vld [vmem:[#allocation7 + $0x30] sm:$0xff]
    %v209 = vld [vmem:[#allocation7 + $0x38] sm:$0xff]
    %v210 = vld [vmem:[#allocation7 + $0x40] sm:$0xff]
    %v211 = vld [vmem:[#allocation7 + $0x48] sm:$0xff]
    %v212 = vld [vmem:[#allocation7 + $0x50] sm:$0xff]
    %v213 = vld [vmem:[#allocation7 + $0x58] sm:$0xff]
    %v214 = vld [vmem:[#allocation7 + $0x60] sm:$0xff]
    %v215 = vld [vmem:[#allocation7 + $0x68] sm:$0xff]
    %v216 = vld [vmem:[#allocation7 + $0x70] sm:$0xff]
    %v217 = vld [vmem:[#allocation7 + $0x78] sm:$0xff]
    %v218 = vld [vmem:[%s4] sm:$0x1]
    %v220 = vlaneseq
    %v221 = vshrl.u32 %v220, 7
    %v222 = vsub.s32 0, %v221
    %v223 = vrot.slane %v218, %v222
    %225 = vmatprep.subr.mxu0 0.0
    %226 = vmatpush1.msra.mxu0 %v202
    %227 = vmatprep.subr.mxu0 0.0
    %228 = vmatpush1.msra.mxu0 %v203
    %229 = vmatprep.subr.mxu0 0.0
    %230 = vmatpush1.msra.mxu0 %v204
    %231 = vmatprep.subr.mxu0 0.0
    %232 = vmatpush1.msra.mxu0 %v205
    %233 = vmatprep.subr.mxu0 0.0
    %234 = vmatpush1.msra.mxu0 %v206
    %235 = vmatprep.subr.mxu0 0.0
    %236 = vmatpush1.msra.mxu0 %v207
    %237 = vmatprep.subr.mxu0 0.0
    %238 = vmatpush1.msra.mxu0 %v208
    %239 = vmatprep.subr.mxu0 0.0
    %240 = vmatpush1.msra.mxu0 %v209
    %241 = vmatprep.subr.mxu0 0.0
    %242 = vmatpush1.msra.mxu0 %v210
    %243 = vmatprep.subr.mxu0 0.0
    %244 = vmatpush1.msra.mxu0 %v211
    %245 = vmatprep.subr.mxu0 0.0
    %246 = vmatpush1.msra.mxu0 %v212
    %247 = vmatprep.subr.mxu0 0.0
    %248 = vmatpush1.msra.mxu0 %v213
    %249 = vmatprep.subr.mxu0 0.0
    %250 = vmatpush1.msra.mxu0 %v214
    %251 = vmatprep.subr.mxu0 0.0
    %252 = vmatpush1.msra.mxu0 %v215
    %253 = vmatprep.subr.mxu0 0.0
    %254 = vmatpush1.msra.mxu0 %v216
    %255 = vmatprep.subr.mxu0 0.0
    %256 = vmatpush1.msra.mxu0 %v217
    %257 = vmatprep.subr.mxu0 0.0
    %258 = vmatpush1.msra.mxu0 0.0
    %259 = vmatprep.subr.mxu0 0.0
    %260 = vmatpush1.msra.mxu0 0.0
    %261 = vmatprep.subr.mxu0 0.0
    %262 = vmatpush1.msra.mxu0 0.0
    %263 = vmatprep.subr.mxu0 0.0
    %264 = vmatpush1.msra.mxu0 0.0
    %265 = vmatprep.subr.mxu0 0.0
    %266 = vmatpush1.msra.mxu0 0.0
    %267 = vmatprep.subr.mxu0 0.0
    %268 = vmatpush1.msra.mxu0 0.0
    %269 = vmatprep.subr.mxu0 0.0
    %270 = vmatpush1.msra.mxu0 0.0
    %271 = vmatprep.subr.mxu0 0.0
    %272 = vmatpush1.msra.mxu0 0.0
    %273 = vmatprep.subr.mxu0 0.0
    %274 = vmatpush1.msra.mxu0 0.0
    %275 = vmatprep.subr.mxu0 0.0
    %276 = vmatpush1.msra.mxu0 0.0
    %277 = vmatprep.subr.mxu0 0.0
    %278 = vmatpush1.msra.mxu0 0.0
    %279 = vmatprep.subr.mxu0 0.0
    %280 = vmatpush1.msra.mxu0 0.0
    %281 = vmatprep.subr.mxu0 0.0
    %282 = vmatpush1.msra.mxu0 0.0
    %283 = vmatprep.subr.mxu0 0.0
    %284 = vmatpush1.msra.mxu0 0.0
    %285 = vmatprep.subr.mxu0 0.0
    %286 = vmatpush1.msra.mxu0 0.0
    %287 = vmatprep.subr.mxu0 0.0
    %288 = vmatpush1.msra.mxu0 0.0
    %289 = vmatprep.mubr.f32.mxu0 0.0
    %290 = vmatmul.mubr.f32.gmra.mrb[0].mxu0 %v200
    %v291 = vpop.f32.mrb[0].mxu0
    %v292 = vadd.f32 %v223, %v291
    %v293 = vpop.f32.mrb[0].mxu0
    %294 = vmatprep.mubr.f32.mxu0 0.0
    %295 = vmatmul.mubr.f32.gmra.mrb[0].mxu0 %v201
    %v296 = vpop.f32.mrb[0].mxu0
    %v297 = vadd.f32 %v223, %v296
    %v298 = vpop.f32.mrb[0].mxu0
    %299 = vdwg.mxu0
    %vm300 = vcmp.gt.f32.partialorder %v292, 0.0
    %vm301 = vcmp.gt.f32.partialorder %v297, 0.0
    %v302 = vmul.f32 %v292, 0.2
    %v303 = vmul.f32 %v297, 0.2
    %v304 = vsel %vm300, %v292, %v302
    %v305 = vsel %vm301, %v297, %v303
    %v306 = vld [vmem:[#allocation8] sm:$0xff]
    %v307 = vld [vmem:[#allocation8 + $0x8] sm:$0xff]
    %v308 = vld [vmem:[#allocation8 + $0x10] sm:$0xff]
    %v309 = vld [vmem:[#allocation8 + $0x18] sm:$0xff]
    %v310 = vld [vmem:[#allocation8 + $0x20] sm:$0xff]
    %v311 = vld [vmem:[#allocation8 + $0x28] sm:$0xff]
    %v312 = vld [vmem:[#allocation8 + $0x30] sm:$0xff]
    %v313 = vld [vmem:[#allocation8 + $0x38] sm:$0xff]
    %v314 = vld [vmem:[#allocation8 + $0x40] sm:$0xff]
    %v315 = vld [vmem:[#allocation8 + $0x48] sm:$0xff]
    %v316 = vld [vmem:[#allocation8 + $0x50] sm:$0xff]
    %v317 = vld [vmem:[#allocation8 + $0x58] sm:$0xff]
    %v318 = vld [vmem:[#allocation8 + $0x60] sm:$0xff]
    %v319 = vld [vmem:[#allocation8 + $0x68] sm:$0xff]
    %v320 = vld [vmem:[#allocation8 + $0x70] sm:$0xff]
    %v321 = vld [vmem:[#allocation8 + $0x78] sm:$0xff]
    %v322 = vld [vmem:[%s6] sm:$0x1]
    %v324 = vlaneseq
    %v325 = vshrl.u32 %v324, 7
    %v326 = vsub.s32 0, %v325
    %v327 = vrot.slane %v322, %v326
    %329 = vmatprep.subr.mxu0 0.0
    %330 = vmatpush1.msra.mxu0 %v306
    %331 = vmatprep.subr.mxu0 0.0
    %332 = vmatpush1.msra.mxu0 %v307
    %333 = vmatprep.subr.mxu0 0.0
    %334 = vmatpush1.msra.mxu0 %v308
    %335 = vmatprep.subr.mxu0 0.0
    %336 = vmatpush1.msra.mxu0 %v309
    %337 = vmatprep.subr.mxu0 0.0
    %338 = vmatpush1.msra.mxu0 %v310
    %339 = vmatprep.subr.mxu0 0.0
    %340 = vmatpush1.msra.mxu0 %v311
    %341 = vmatprep.subr.mxu0 0.0
    %342 = vmatpush1.msra.mxu0 %v312
    %343 = vmatprep.subr.mxu0 0.0
    %344 = vmatpush1.msra.mxu0 %v313
    %345 = vmatprep.subr.mxu0 0.0
    %346 = vmatpush1.msra.mxu0 %v314
    %347 = vmatprep.subr.mxu0 0.0
    %348 = vmatpush1.msra.mxu0 %v315
    %349 = vmatprep.subr.mxu0 0.0
    %350 = vmatpush1.msra.mxu0 %v316
    %351 = vmatprep.subr.mxu0 0.0
    %352 = vmatpush1.msra.mxu0 %v317
    %353 = vmatprep.subr.mxu0 0.0
    %354 = vmatpush1.msra.mxu0 %v318
    %355 = vmatprep.subr.mxu0 0.0
    %356 = vmatpush1.msra.mxu0 %v319
    %357 = vmatprep.subr.mxu0 0.0
    %358 = vmatpush1.msra.mxu0 %v320
    %359 = vmatprep.subr.mxu0 0.0
    %360 = vmatpush1.msra.mxu0 %v321
    %361 = vmatprep.subr.mxu0 0.0
    %362 = vmatpush1.msra.mxu0 0.0
    %363 = vmatprep.subr.mxu0 0.0
    %364 = vmatpush1.msra.mxu0 0.0
    %365 = vmatprep.subr.mxu0 0.0
    %366 = vmatpush1.msra.mxu0 0.0
    %367 = vmatprep.subr.mxu0 0.0
    %368 = vmatpush1.msra.mxu0 0.0
    %369 = vmatprep.subr.mxu0 0.0
    %370 = vmatpush1.msra.mxu0 0.0
    %371 = vmatprep.subr.mxu0 0.0
    %372 = vmatpush1.msra.mxu0 0.0
    %373 = vmatprep.subr.mxu0 0.0
    %374 = vmatpush1.msra.mxu0 0.0
    %375 = vmatprep.subr.mxu0 0.0
    %376 = vmatpush1.msra.mxu0 0.0
    %377 = vmatprep.subr.mxu0 0.0
    %378 = vmatpush1.msra.mxu0 0.0
    %379 = vmatprep.subr.mxu0 0.0
    %380 = vmatpush1.msra.mxu0 0.0
    %381 = vmatprep.subr.mxu0 0.0
    %382 = vmatpush1.msra.mxu0 0.0
    %383 = vmatprep.subr.mxu0 0.0
    %384 = vmatpush1.msra.mxu0 0.0
    %385 = vmatprep.subr.mxu0 0.0
    %386 = vmatpush1.msra.mxu0 0.0
    %387 = vmatprep.subr.mxu0 0.0
    %388 = vmatpush1.msra.mxu0 0.0
    %389 = vmatprep.subr.mxu0 0.0
    %390 = vmatpush1.msra.mxu0 0.0
    %391 = vmatprep.subr.mxu0 0.0
    %392 = vmatpush1.msra.mxu0 0.0
    %393 = vmatprep.mubr.f32.mxu0 0.0
    %394 = vmatmul.mubr.f32.gmra.mrb[0].mxu0 %v304
    %v395 = vpop.f32.mrb[0].mxu0
    %v396 = vadd.f32 %v327, %v395
    %v397 = vpop.f32.mrb[0].mxu0
    %398 = vmatprep.mubr.f32.mxu0 0.0
    %399 = vmatmul.mubr.f32.gmra.mrb[0].mxu0 %v305
    %v400 = vpop.f32.mrb[0].mxu0
    %v401 = vadd.f32 %v327, %v400
    %v402 = vpop.f32.mrb[0].mxu0
    %403 = vdwg.mxu0
    %vm404 = vcmp.gt.f32.partialorder %v396, 0.0
    %vm405 = vcmp.gt.f32.partialorder %v401, 0.0
    %v406 = vmul.f32 %v396, 0.2
    %v407 = vmul.f32 %v401, 0.2
    %v408 = vsel %vm404, %v396, %v406
    %v409 = vsel %vm405, %v401, %v407
    %v410 = vld [vmem:[#allocation10] sm:$0xff]
    %v411 = vld [vmem:[#allocation10 + $0x8] sm:$0xff]
    %v412 = vld [vmem:[#allocation10 + $0x10] sm:$0xff]
    %v413 = vld [vmem:[#allocation10 + $0x18] sm:$0xff]
    %v414 = vld [vmem:[#allocation10 + $0x20] sm:$0xff]
    %v415 = vld [vmem:[#allocation10 + $0x28] sm:$0xff]
    %v416 = vld [vmem:[#allocation10 + $0x30] sm:$0xff]
    %v417 = vld [vmem:[#allocation10 + $0x38] sm:$0xff]
    %v418 = vld [vmem:[#allocation10 + $0x40] sm:$0xff]
    %v419 = vld [vmem:[#allocation10 + $0x48] sm:$0xff]
    %v420 = vld [vmem:[#allocation10 + $0x50] sm:$0xff]
    %v421 = vld [vmem:[#allocation10 + $0x58] sm:$0xff]
    %v422 = vld [vmem:[#allocation10 + $0x60] sm:$0xff]
    %v423 = vld [vmem:[#allocation10 + $0x68] sm:$0xff]
    %v424 = vld [vmem:[#allocation10 + $0x70] sm:$0xff]
    %v425 = vld [vmem:[#allocation10 + $0x78] sm:$0xff]
    %v426 = vld [vmem:[#allocation10 + $0x80] sm:$0xff]
    %v427 = vld [vmem:[#allocation10 + $0x88] sm:$0xff]
    %v428 = vld [vmem:[#allocation10 + $0x90] sm:$0xff]
    %v429 = vld [vmem:[#allocation10 + $0x98] sm:$0xff]
    %v430 = vld [vmem:[#allocation10 + $0xa0] sm:$0xff]
    %v431 = vld [vmem:[#allocation10 + $0xa8] sm:$0xff]
    %v432 = vld [vmem:[#allocation10 + $0xb0] sm:$0xff]
    %v433 = vld [vmem:[#allocation10 + $0xb8] sm:$0xff]
    %v434 = vld [vmem:[#allocation10 + $0xc0] sm:$0xff]
    %v435 = vld [vmem:[#allocation10 + $0xc8] sm:$0xff]
    %v436 = vld [vmem:[#allocation10 + $0xd0] sm:$0xff]
    %v437 = vld [vmem:[#allocation10 + $0xd8] sm:$0xff]
    %v438 = vld [vmem:[#allocation10 + $0xe0] sm:$0xff]
    %v439 = vld [vmem:[#allocation10 + $0xe8] sm:$0xff]
    %v440 = vld [vmem:[#allocation10 + $0xf0] sm:$0xff]
    %v441 = vld [vmem:[#allocation10 + $0xf8] sm:$0xff]
    %v442 = vld [vmem:[%s8] sm:$0x3]
    %v444 = vlaneseq
    %v445 = vshrl.u32 %v444, 7
    %v446 = vsub.s32 0, %v445
    %v447 = vrot.slane %v442, %v446
    %v448 = vlaneseq
    %v449 = vshrl.u32 %v448, 7
    %v450 = vsub.s32 1, %v449
    %v451 = vrot.slane %v442, %v450
    %454 = vmatprep.subr.mxu0 %v411
    %455 = vmatpush1.msra.mxu0 %v410
    %456 = vmatprep.subr.mxu0 %v413
    %457 = vmatpush1.msra.mxu0 %v412
    %458 = vmatprep.subr.mxu0 %v415
    %459 = vmatpush1.msra.mxu0 %v414
    %460 = vmatprep.subr.mxu0 %v417
    %461 = vmatpush1.msra.mxu0 %v416
    %462 = vmatprep.subr.mxu0 %v419
    %463 = vmatpush1.msra.mxu0 %v418
    %464 = vmatprep.subr.mxu0 %v421
    %465 = vmatpush1.msra.mxu0 %v420
    %466 = vmatprep.subr.mxu0 %v423
    %467 = vmatpush1.msra.mxu0 %v422
    %468 = vmatprep.subr.mxu0 %v425
    %469 = vmatpush1.msra.mxu0 %v424
    %470 = vmatprep.subr.mxu0 %v427
    %471 = vmatpush1.msra.mxu0 %v426
    %472 = vmatprep.subr.mxu0 %v429
    %473 = vmatpush1.msra.mxu0 %v428
    %474 = vmatprep.subr.mxu0 %v431
    %475 = vmatpush1.msra.mxu0 %v430
    %476 = vmatprep.subr.mxu0 %v433
    %477 = vmatpush1.msra.mxu0 %v432
    %478 = vmatprep.subr.mxu0 %v435
    %479 = vmatpush1.msra.mxu0 %v434
    %480 = vmatprep.subr.mxu0 %v437
    %481 = vmatpush1.msra.mxu0 %v436
    %482 = vmatprep.subr.mxu0 %v439
    %483 = vmatpush1.msra.mxu0 %v438
    %484 = vmatprep.subr.mxu0 %v441
    %485 = vmatpush1.msra.mxu0 %v440
    %486 = vmatprep.subr.mxu0 0.0
    %487 = vmatpush1.msra.mxu0 0.0
    %488 = vmatprep.subr.mxu0 0.0
    %489 = vmatpush1.msra.mxu0 0.0
    %490 = vmatprep.subr.mxu0 0.0
    %491 = vmatpush1.msra.mxu0 0.0
    %492 = vmatprep.subr.mxu0 0.0
    %493 = vmatpush1.msra.mxu0 0.0
    %494 = vmatprep.subr.mxu0 0.0
    %495 = vmatpush1.msra.mxu0 0.0
    %496 = vmatprep.subr.mxu0 0.0
    %497 = vmatpush1.msra.mxu0 0.0
    %498 = vmatprep.subr.mxu0 0.0
    %499 = vmatpush1.msra.mxu0 0.0
    %500 = vmatprep.subr.mxu0 0.0
    %501 = vmatpush1.msra.mxu0 0.0
    %502 = vmatprep.subr.mxu0 0.0
    %503 = vmatpush1.msra.mxu0 0.0
    %504 = vmatprep.subr.mxu0 0.0
    %505 = vmatpush1.msra.mxu0 0.0
    %506 = vmatprep.subr.mxu0 0.0
    %507 = vmatpush1.msra.mxu0 0.0
    %508 = vmatprep.subr.mxu0 0.0
    %509 = vmatpush1.msra.mxu0 0.0
    %510 = vmatprep.subr.mxu0 0.0
    %511 = vmatpush1.msra.mxu0 0.0
    %512 = vmatprep.subr.mxu0 0.0
    %513 = vmatpush1.msra.mxu0 0.0
    %514 = vmatprep.subr.mxu0 0.0
    %515 = vmatpush1.msra.mxu0 0.0
    %516 = vmatprep.subr.mxu0 0.0
    %517 = vmatpush1.msra.mxu0 0.0
    %518 = vmatprep.mubr.f32.mxu0 0.0
    %519 = vmatmul.mubr.f32.gmra.mrb[0].mxu0 %v408
    %v520 = vpop.f32.mrb[0].mxu0
    %v521 = vadd.f32 %v447, %v520
    %v522 = vpop.f32.mrb[0].mxu0
    %v523 = vadd.f32 %v451, %v522
    %524 = vmatprep.mubr.f32.mxu0 0.0
    %525 = vmatmul.mubr.f32.gmra.mrb[0].mxu0 %v409
    %v526 = vpop.f32.mrb[0].mxu0
    %v527 = vadd.f32 %v447, %v526
    %v528 = vpop.f32.mrb[0].mxu0
    %v529 = vadd.f32 %v451, %v528
    %530 = vdwg.mxu0
    %v531 = vtanh.pop %v521
    %v532 = vtanh.pop %v523
    %v533 = vtanh.pop %v527
    %v534 = vtanh.pop %v529
    %535 = vst [vmem:[#allocation11] sm:$0xff] %v531
    %536 = vst [vmem:[#allocation11 + $0x8] sm:$0xff] %v532
    %537 = vst [vmem:[#allocation11 + $0x10] sm:$0xff] %v533
    %538 = vst [vmem:[#allocation11 + $0x18] sm:$0xff] %v534
    // Predicated region
    $region58: #{_small_forward.1} parent=1 // pred_check
      _
    $region59: #{_small_forward.1} parent=1 // pred_check_branch
      %540 = sbr.rel (0) target = $region61
    $region60: #{_small_forward.1} parent=1 // pred_region
      %s542 = ssub.s32 512, 512
      %543 = vsyncadd [#allocation4], %s542
      %s544 = sshll.u32 [#allocation11], 4
      %s545 = int_to_ptr.vmem [resolvable:$true] %s544
      %550 = dma.vmem_to_hbm [thread:$0]  %s545, 512, %s9, [#allocation4], 256, 256, 16
    $region61: #{_small_forward.1} parent=1 // pred_fallthru
      _
    // Predicated region
    $region62: #{_small_forward.1} parent=1 // pred_check
      _
    $region63: #{_small_forward.1} parent=1 // pred_check_branch
      %552 = sbr.rel (0) target = $region65
    $region64: #{_small_forward.1} parent=1 // pred_region
      %553 = dma.done [#allocation4], 512
    $region65: #{_small_forward.1} parent=1 // pred_fallthru
      _
    %554 = vsyncpa [#allocation3], 1
    %555 = vsyncpa [#allocation6], 1
    %556 = vsyncpa [#allocation9], 1
    %557 = vsyncpa [#allocation4], 1

</llo_original>
